<compile_context>
chip_gen: v7x
topology: tpu7x:2x2x1
jax: 0.10.0
libtpu: 0.0.40
codegen_flags: <defaults>
</compile_context>

<pallas_src>
import jax
import jax.numpy as jnp
from jax import lax
from jax.experimental import pallas as pl
from jax.experimental.pallas import tpu as pltpu


def conv1d_same_kernel(w_ref, b_ref, x_ref, o_ref):
    """Direct 'same' 1D convolution over one batch tile.

    w_ref : SMEM (C_out*C_in*K,) f32   flattened weights (scalar prefetch)
    b_ref : SMEM (C_out,)        f32   bias              (scalar prefetch)
    x_ref : VMEM (C_in, TB, L)   f32   input  (channel-major batch tile)
    o_ref : VMEM (C_out, TB, L)  f32   output (channel-major batch tile)
    """
    C_in, TB, L = x_ref.shape
    C_out = o_ref.shape[0]
    K = w_ref.shape[0] // (C_out * C_in)
    pad_left = (K - 1) // 2          # PyTorch 'same' (stride=1, dilation=1)

    # Hoist every SMEM scalar read out of the FMA chain.
    w = [[[w_ref[(co * C_in + ci) * K + j] for j in range(K)]
          for ci in range(C_in)]
         for co in range(C_out)]

    # Lane index, computed once, used to zero the wrapped halo lanes.
    lane = lax.broadcasted_iota(jnp.int32, (TB, L), dimension=1)

    # Bias-initialized f32 accumulators, one (TB, L) slab per output channel.
    acc = [jnp.full((TB, L), b_ref[co], dtype=jnp.float32) for co in range(C_out)]

    for ci in range(C_in):
        xc = x_ref[ci]                       # (TB, L)
        for j in range(K):                   # static unroll over the K taps
            s = j - pad_left                 # out[l] += w * x[l + s]
            if s == 0:
                shifted = xc
            else:
                # In-vreg lane rotate (XLU), then zero the wrapped lanes so it
                # matches a zero-padded shift (the 'same' halo).
                rolled = pltpu.roll(xc, (-s) % L, axis=1)
                if s > 0:
                    shifted = jnp.where(lane < L - s, rolled, 0.0)
                else:
                    shifted = jnp.where(lane >= -s, rolled, 0.0)
            # Reuse the shifted tap across all output channels (VPU FMAs).
            for co in range(C_out):
                acc[co] = acc[co] + w[co][ci][j] * shifted

    # Contiguous, lane-dense per-channel stores (no stack/interleave epilogue).
    for co in range(C_out):
        o_ref[co] = acc[co].astype(o_ref.dtype)


def _pick_batch_tile(b):
    for tb in (512, 256, 128, 64, 32, 16, 8):
        if b % tb == 0:
            return tb
    return b


@jax.jit
def conv1d_same_pallas(x, weight, bias):
    """x: (B, C_in, L); weight: (C_out, C_in, K); bias: (C_out,) -> (B, C_out, L)."""
    B, C_in, L = x.shape
    C_out, _, K = weight.shape
    assert L >= K, "kernel assumes L >= K (default config: L=128, K=16)"

    TB = _pick_batch_tile(B)

    # Channel-major layout so each block's trailing dims are a lane-dense
    # (TB, L) slab.  Wrapper transposes are layout plumbing, not compute.
    x_cm = jnp.transpose(x.astype(jnp.float32), (1, 0, 2))       # (C_in, B, L)
    w_flat = weight.reshape(-1).astype(jnp.float32)              # (C_out*C_in*K,)
    b = bias.astype(jnp.float32)                                 # (C_out,)

    grid_spec = pltpu.PrefetchScalarGridSpec(
        num_scalar_prefetch=2,               # w_flat, bias -> SMEM
        grid=(B // TB,),                     # batch tiles (parallel axis)
        in_specs=[
            pl.BlockSpec((C_in, TB, L), lambda i, w_r, b_r: (0, i, 0)),
        ],
        out_specs=pl.BlockSpec((C_out, TB, L), lambda i, w_r, b_r: (0, i, 0)),
    )
    # For very long L one would additionally tile the length axis in >=512-lane
    # blocks with a K-1 halo; at L=128 a single lane block per step is optimal.

    out_cm = pl.pallas_call(
        conv1d_same_kernel,
        out_shape=jax.ShapeDtypeStruct((C_out, B, L), jnp.float32),
        grid_spec=grid_spec,
        compiler_params=pltpu.CompilerParams(
            dimension_semantics=("parallel",),
            # Keep double-buffered in/out blocks well under v7x's 64 MiB VMEM.
            vmem_limit_bytes=32 * 1024 * 1024,
        ),
    )(w_flat, b, x_cm)

    return jnp.transpose(out_cm, (1, 0, 2))                      # (B, C_out, L)


def conv1d_same_ref(x, weight, bias):
    """Pure-JAX reference with PyTorch 'same' padding semantics."""
    K = weight.shape[-1]
    pad_left = (K - 1) // 2
    pad_right = (K - 1) - pad_left
    out = lax.conv_general_dilated(
        x, weight,
        window_strides=(1,),
        padding=[(pad_left, pad_right)],
        dimension_numbers=("NCH", "OIH", "NCH"),
    )
    return out + bias[None, :, None]


if __name__ == "__main__":
    # Module defaults: in_channels=1, out_channels=2, kernel_size=16, n_layers=1
    B, C_in, C_out, K, L = 2, 1, 2, 16, 128

    key = jax.random.PRNGKey(0)
    kx, kw, kb = jax.random.split(key, 3)

    x = jax.random.normal(kx, (B, C_in, L), dtype=jnp.float32)

    # PyTorch Conv1d default init: U(-1/sqrt(fan_in), 1/sqrt(fan_in))
    fan_in = C_in * K
    bound = 1.0 / jnp.sqrt(jnp.float32(fan_in))
    weight = jax.random.uniform(kw, (C_out, C_in, K), jnp.float32, -bound, bound)
    bias = jax.random.uniform(kb, (C_out,), jnp.float32, -bound, bound)

    out = conv1d_same_pallas(x, weight, bias)
    out = jax.block_until_ready(out)

    ref = conv1d_same_ref(x, weight, bias)
    assert out.shape == (B, C_out, L)
    assert jnp.allclose(out, ref, atol=1e-5, rtol=1e-5), "mismatch vs reference conv"

    print("KERNEL_OK")
</pallas_src>

<mosaic_0001>
module attributes {stable_mosaic.version = 11 : i64} {
  func.func @conv1d_same_kernel(%arg0: i32, %arg1: memref<32xf32, #tpu.memory_space<smem>>, %arg2: memref<2xf32, #tpu.memory_space<smem>>, %arg3: memref<1x2x128xf32, #tpu.memory_space<vmem>>, %arg4: memref<2x2x128xf32, #tpu.memory_space<vmem>>) attributes {dimension_semantics = [#tpu.dimension_semantics<parallel>], iteration_bounds = array<i64: 1>, scalar_prefetch = 2 : i64, scratch_operands = 0 : i64, tpu.core_type = #tpu.core_type<tc>, window_params = [{transform_indices = @transform_0, window_bounds = array<i64: 1, 2, 128>}, {transform_indices = @transform_1, window_bounds = array<i64: 2, 2, 128>}]} {
    %c0 = arith.constant 0 : index
    %0 = memref.load %arg1[%c0] : memref<32xf32, #tpu.memory_space<smem>>
    %c1 = arith.constant 1 : index
    %1 = memref.load %arg1[%c1] : memref<32xf32, #tpu.memory_space<smem>>
    %c2 = arith.constant 2 : index
    %2 = memref.load %arg1[%c2] : memref<32xf32, #tpu.memory_space<smem>>
    %c3 = arith.constant 3 : index
    %3 = memref.load %arg1[%c3] : memref<32xf32, #tpu.memory_space<smem>>
    %c4 = arith.constant 4 : index
    %4 = memref.load %arg1[%c4] : memref<32xf32, #tpu.memory_space<smem>>
    %c5 = arith.constant 5 : index
    %5 = memref.load %arg1[%c5] : memref<32xf32, #tpu.memory_space<smem>>
    %c6 = arith.constant 6 : index
    %6 = memref.load %arg1[%c6] : memref<32xf32, #tpu.memory_space<smem>>
    %c7 = arith.constant 7 : index
    %7 = memref.load %arg1[%c7] : memref<32xf32, #tpu.memory_space<smem>>
    %c8 = arith.constant 8 : index
    %8 = memref.load %arg1[%c8] : memref<32xf32, #tpu.memory_space<smem>>
    %c9 = arith.constant 9 : index
    %9 = memref.load %arg1[%c9] : memref<32xf32, #tpu.memory_space<smem>>
    %c10 = arith.constant 10 : index
    %10 = memref.load %arg1[%c10] : memref<32xf32, #tpu.memory_space<smem>>
    %c11 = arith.constant 11 : index
    %11 = memref.load %arg1[%c11] : memref<32xf32, #tpu.memory_space<smem>>
    %c12 = arith.constant 12 : index
    %12 = memref.load %arg1[%c12] : memref<32xf32, #tpu.memory_space<smem>>
    %c13 = arith.constant 13 : index
    %13 = memref.load %arg1[%c13] : memref<32xf32, #tpu.memory_space<smem>>
    %c14 = arith.constant 14 : index
    %14 = memref.load %arg1[%c14] : memref<32xf32, #tpu.memory_space<smem>>
    %c15 = arith.constant 15 : index
    %15 = memref.load %arg1[%c15] : memref<32xf32, #tpu.memory_space<smem>>
    %c16 = arith.constant 16 : index
    %16 = memref.load %arg1[%c16] : memref<32xf32, #tpu.memory_space<smem>>
    %c17 = arith.constant 17 : index
    %17 = memref.load %arg1[%c17] : memref<32xf32, #tpu.memory_space<smem>>
    %c18 = arith.constant 18 : index
    %18 = memref.load %arg1[%c18] : memref<32xf32, #tpu.memory_space<smem>>
    %c19 = arith.constant 19 : index
    %19 = memref.load %arg1[%c19] : memref<32xf32, #tpu.memory_space<smem>>
    %c20 = arith.constant 20 : index
    %20 = memref.load %arg1[%c20] : memref<32xf32, #tpu.memory_space<smem>>
    %c21 = arith.constant 21 : index
    %21 = memref.load %arg1[%c21] : memref<32xf32, #tpu.memory_space<smem>>
    %c22 = arith.constant 22 : index
    %22 = memref.load %arg1[%c22] : memref<32xf32, #tpu.memory_space<smem>>
    %c23 = arith.constant 23 : index
    %23 = memref.load %arg1[%c23] : memref<32xf32, #tpu.memory_space<smem>>
    %c24 = arith.constant 24 : index
    %24 = memref.load %arg1[%c24] : memref<32xf32, #tpu.memory_space<smem>>
    %c25 = arith.constant 25 : index
    %25 = memref.load %arg1[%c25] : memref<32xf32, #tpu.memory_space<smem>>
    %c26 = arith.constant 26 : index
    %26 = memref.load %arg1[%c26] : memref<32xf32, #tpu.memory_space<smem>>
    %c27 = arith.constant 27 : index
    %27 = memref.load %arg1[%c27] : memref<32xf32, #tpu.memory_space<smem>>
    %c28 = arith.constant 28 : index
    %28 = memref.load %arg1[%c28] : memref<32xf32, #tpu.memory_space<smem>>
    %c29 = arith.constant 29 : index
    %29 = memref.load %arg1[%c29] : memref<32xf32, #tpu.memory_space<smem>>
    %c30 = arith.constant 30 : index
    %30 = memref.load %arg1[%c30] : memref<32xf32, #tpu.memory_space<smem>>
    %c31 = arith.constant 31 : index
    %31 = memref.load %arg1[%c31] : memref<32xf32, #tpu.memory_space<smem>>
    %32 = tpu.iota {dimensions = array<i32: 1>} : vector<2x128xi32>
    %c0_0 = arith.constant 0 : index
    %33 = memref.load %arg2[%c0_0] : memref<2xf32, #tpu.memory_space<smem>>
    %34 = vector.broadcast %33 : f32 to vector<2x128xf32>
    %c1_1 = arith.constant 1 : index
    %35 = memref.load %arg2[%c1_1] : memref<2xf32, #tpu.memory_space<smem>>
    %36 = vector.broadcast %35 : f32 to vector<2x128xf32>
    %c0_2 = arith.constant 0 : index
    %c0_3 = arith.constant 0 : index
    %c0_4 = arith.constant 0 : index
    %37 = vector.load %arg3[%c0_2, %c0_3, %c0_4] : memref<1x2x128xf32, #tpu.memory_space<vmem>>, vector<1x2x128xf32>
    %38 = vector.shape_cast %37 : vector<1x2x128xf32> to vector<2x128xf32>
    %c7_i32 = arith.constant 7 : i32
    %39 = tpu.dynamic_rotate %38 by %c7_i32 dim 1 : vector<2x128xf32>, i32 -> vector<2x128xf32>
    %c7_i32_5 = arith.constant 7 : i32
    %40 = vector.broadcast %c7_i32_5 : i32 to vector<2x128xi32>
    %41 = arith.cmpi sge, %32, %40 : vector<2x128xi32>
    %cst = arith.constant 0.000000e+00 : f32
    %42 = vector.broadcast %cst : f32 to vector<2x128xf32>
    %43 = arith.select %41, %39, %42 : vector<2x128xi1>, vector<2x128xf32>
    %44 = vector.broadcast %0 : f32 to vector<2x128xf32>
    %45 = arith.mulf %44, %43 : vector<2x128xf32>
    %46 = arith.addf %34, %45 : vector<2x128xf32>
    %47 = vector.broadcast %16 : f32 to vector<2x128xf32>
    %48 = arith.mulf %47, %43 : vector<2x128xf32>
    %49 = arith.addf %36, %48 : vector<2x128xf32>
    %c6_i32 = arith.constant 6 : i32
    %50 = tpu.dynamic_rotate %38 by %c6_i32 dim 1 : vector<2x128xf32>, i32 -> vector<2x128xf32>
    %c6_i32_6 = arith.constant 6 : i32
    %51 = vector.broadcast %c6_i32_6 : i32 to vector<2x128xi32>
    %52 = arith.cmpi sge, %32, %51 : vector<2x128xi32>
    %cst_7 = arith.constant 0.000000e+00 : f32
    %53 = vector.broadcast %cst_7 : f32 to vector<2x128xf32>
    %54 = arith.select %52, %50, %53 : vector<2x128xi1>, vector<2x128xf32>
    %55 = vector.broadcast %1 : f32 to vector<2x128xf32>
    %56 = arith.mulf %55, %54 : vector<2x128xf32>
    %57 = arith.addf %46, %56 : vector<2x128xf32>
    %58 = vector.broadcast %17 : f32 to vector<2x128xf32>
    %59 = arith.mulf %58, %54 : vector<2x128xf32>
    %60 = arith.addf %49, %59 : vector<2x128xf32>
    %c5_i32 = arith.constant 5 : i32
    %61 = tpu.dynamic_rotate %38 by %c5_i32 dim 1 : vector<2x128xf32>, i32 -> vector<2x128xf32>
    %c5_i32_8 = arith.constant 5 : i32
    %62 = vector.broadcast %c5_i32_8 : i32 to vector<2x128xi32>
    %63 = arith.cmpi sge, %32, %62 : vector<2x128xi32>
    %cst_9 = arith.constant 0.000000e+00 : f32
    %64 = vector.broadcast %cst_9 : f32 to vector<2x128xf32>
    %65 = arith.select %63, %61, %64 : vector<2x128xi1>, vector<2x128xf32>
    %66 = vector.broadcast %2 : f32 to vector<2x128xf32>
    %67 = arith.mulf %66, %65 : vector<2x128xf32>
    %68 = arith.addf %57, %67 : vector<2x128xf32>
    %69 = vector.broadcast %18 : f32 to vector<2x128xf32>
    %70 = arith.mulf %69, %65 : vector<2x128xf32>
    %71 = arith.addf %60, %70 : vector<2x128xf32>
    %c4_i32 = arith.constant 4 : i32
    %72 = tpu.dynamic_rotate %38 by %c4_i32 dim 1 : vector<2x128xf32>, i32 -> vector<2x128xf32>
    %c4_i32_10 = arith.constant 4 : i32
    %73 = vector.broadcast %c4_i32_10 : i32 to vector<2x128xi32>
    %74 = arith.cmpi sge, %32, %73 : vector<2x128xi32>
    %cst_11 = arith.constant 0.000000e+00 : f32
    %75 = vector.broadcast %cst_11 : f32 to vector<2x128xf32>
    %76 = arith.select %74, %72, %75 : vector<2x128xi1>, vector<2x128xf32>
    %77 = vector.broadcast %3 : f32 to vector<2x128xf32>
    %78 = arith.mulf %77, %76 : vector<2x128xf32>
    %79 = arith.addf %68, %78 : vector<2x128xf32>
    %80 = vector.broadcast %19 : f32 to vector<2x128xf32>
    %81 = arith.mulf %80, %76 : vector<2x128xf32>
    %82 = arith.addf %71, %81 : vector<2x128xf32>
    %c3_i32 = arith.constant 3 : i32
    %83 = tpu.dynamic_rotate %38 by %c3_i32 dim 1 : vector<2x128xf32>, i32 -> vector<2x128xf32>
    %c3_i32_12 = arith.constant 3 : i32
    %84 = vector.broadcast %c3_i32_12 : i32 to vector<2x128xi32>
    %85 = arith.cmpi sge, %32, %84 : vector<2x128xi32>
    %cst_13 = arith.constant 0.000000e+00 : f32
    %86 = vector.broadcast %cst_13 : f32 to vector<2x128xf32>
    %87 = arith.select %85, %83, %86 : vector<2x128xi1>, vector<2x128xf32>
    %88 = vector.broadcast %4 : f32 to vector<2x128xf32>
    %89 = arith.mulf %88, %87 : vector<2x128xf32>
    %90 = arith.addf %79, %89 : vector<2x128xf32>
    %91 = vector.broadcast %20 : f32 to vector<2x128xf32>
    %92 = arith.mulf %91, %87 : vector<2x128xf32>
    %93 = arith.addf %82, %92 : vector<2x128xf32>
    %c2_i32 = arith.constant 2 : i32
    %94 = tpu.dynamic_rotate %38 by %c2_i32 dim 1 : vector<2x128xf32>, i32 -> vector<2x128xf32>
    %c2_i32_14 = arith.constant 2 : i32
    %95 = vector.broadcast %c2_i32_14 : i32 to vector<2x128xi32>
    %96 = arith.cmpi sge, %32, %95 : vector<2x128xi32>
    %cst_15 = arith.constant 0.000000e+00 : f32
    %97 = vector.broadcast %cst_15 : f32 to vector<2x128xf32>
    %98 = arith.select %96, %94, %97 : vector<2x128xi1>, vector<2x128xf32>
    %99 = vector.broadcast %5 : f32 to vector<2x128xf32>
    %100 = arith.mulf %99, %98 : vector<2x128xf32>
    %101 = arith.addf %90, %100 : vector<2x128xf32>
    %102 = vector.broadcast %21 : f32 to vector<2x128xf32>
    %103 = arith.mulf %102, %98 : vector<2x128xf32>
    %104 = arith.addf %93, %103 : vector<2x128xf32>
    %c1_i32 = arith.constant 1 : i32
    %105 = tpu.dynamic_rotate %38 by %c1_i32 dim 1 : vector<2x128xf32>, i32 -> vector<2x128xf32>
    %c1_i32_16 = arith.constant 1 : i32
    %106 = vector.broadcast %c1_i32_16 : i32 to vector<2x128xi32>
    %107 = arith.cmpi sge, %32, %106 : vector<2x128xi32>
    %cst_17 = arith.constant 0.000000e+00 : f32
    %108 = vector.broadcast %cst_17 : f32 to vector<2x128xf32>
    %109 = arith.select %107, %105, %108 : vector<2x128xi1>, vector<2x128xf32>
    %110 = vector.broadcast %6 : f32 to vector<2x128xf32>
    %111 = arith.mulf %110, %109 : vector<2x128xf32>
    %112 = arith.addf %101, %111 : vector<2x128xf32>
    %113 = vector.broadcast %22 : f32 to vector<2x128xf32>
    %114 = arith.mulf %113, %109 : vector<2x128xf32>
    %115 = arith.addf %104, %114 : vector<2x128xf32>
    %116 = vector.broadcast %7 : f32 to vector<2x128xf32>
    %117 = arith.mulf %116, %38 : vector<2x128xf32>
    %118 = arith.addf %112, %117 : vector<2x128xf32>
    %119 = vector.broadcast %23 : f32 to vector<2x128xf32>
    %120 = arith.mulf %119, %38 : vector<2x128xf32>
    %121 = arith.addf %115, %120 : vector<2x128xf32>
    %c127_i32 = arith.constant 127 : i32
    %122 = tpu.dynamic_rotate %38 by %c127_i32 dim 1 : vector<2x128xf32>, i32 -> vector<2x128xf32>
    %c127_i32_18 = arith.constant 127 : i32
    %123 = vector.broadcast %c127_i32_18 : i32 to vector<2x128xi32>
    %124 = arith.cmpi slt, %32, %123 : vector<2x128xi32>
    %cst_19 = arith.constant 0.000000e+00 : f32
    %125 = vector.broadcast %cst_19 : f32 to vector<2x128xf32>
    %126 = arith.select %124, %122, %125 : vector<2x128xi1>, vector<2x128xf32>
    %127 = vector.broadcast %8 : f32 to vector<2x128xf32>
    %128 = arith.mulf %127, %126 : vector<2x128xf32>
    %129 = arith.addf %118, %128 : vector<2x128xf32>
    %130 = vector.broadcast %24 : f32 to vector<2x128xf32>
    %131 = arith.mulf %130, %126 : vector<2x128xf32>
    %132 = arith.addf %121, %131 : vector<2x128xf32>
    %c126_i32 = arith.constant 126 : i32
    %133 = tpu.dynamic_rotate %38 by %c126_i32 dim 1 : vector<2x128xf32>, i32 -> vector<2x128xf32>
    %c126_i32_20 = arith.constant 126 : i32
    %134 = vector.broadcast %c126_i32_20 : i32 to vector<2x128xi32>
    %135 = arith.cmpi slt, %32, %134 : vector<2x128xi32>
    %cst_21 = arith.constant 0.000000e+00 : f32
    %136 = vector.broadcast %cst_21 : f32 to vector<2x128xf32>
    %137 = arith.select %135, %133, %136 : vector<2x128xi1>, vector<2x128xf32>
    %138 = vector.broadcast %9 : f32 to vector<2x128xf32>
    %139 = arith.mulf %138, %137 : vector<2x128xf32>
    %140 = arith.addf %129, %139 : vector<2x128xf32>
    %141 = vector.broadcast %25 : f32 to vector<2x128xf32>
    %142 = arith.mulf %141, %137 : vector<2x128xf32>
    %143 = arith.addf %132, %142 : vector<2x128xf32>
    %c125_i32 = arith.constant 125 : i32
    %144 = tpu.dynamic_rotate %38 by %c125_i32 dim 1 : vector<2x128xf32>, i32 -> vector<2x128xf32>
    %c125_i32_22 = arith.constant 125 : i32
    %145 = vector.broadcast %c125_i32_22 : i32 to vector<2x128xi32>
    %146 = arith.cmpi slt, %32, %145 : vector<2x128xi32>
    %cst_23 = arith.constant 0.000000e+00 : f32
    %147 = vector.broadcast %cst_23 : f32 to vector<2x128xf32>
    %148 = arith.select %146, %144, %147 : vector<2x128xi1>, vector<2x128xf32>
    %149 = vector.broadcast %10 : f32 to vector<2x128xf32>
    %150 = arith.mulf %149, %148 : vector<2x128xf32>
    %151 = arith.addf %140, %150 : vector<2x128xf32>
    %152 = vector.broadcast %26 : f32 to vector<2x128xf32>
    %153 = arith.mulf %152, %148 : vector<2x128xf32>
    %154 = arith.addf %143, %153 : vector<2x128xf32>
    %c124_i32 = arith.constant 124 : i32
    %155 = tpu.dynamic_rotate %38 by %c124_i32 dim 1 : vector<2x128xf32>, i32 -> vector<2x128xf32>
    %c124_i32_24 = arith.constant 124 : i32
    %156 = vector.broadcast %c124_i32_24 : i32 to vector<2x128xi32>
    %157 = arith.cmpi slt, %32, %156 : vector<2x128xi32>
    %cst_25 = arith.constant 0.000000e+00 : f32
    %158 = vector.broadcast %cst_25 : f32 to vector<2x128xf32>
    %159 = arith.select %157, %155, %158 : vector<2x128xi1>, vector<2x128xf32>
    %160 = vector.broadcast %11 : f32 to vector<2x128xf32>
    %161 = arith.mulf %160, %159 : vector<2x128xf32>
    %162 = arith.addf %151, %161 : vector<2x128xf32>
    %163 = vector.broadcast %27 : f32 to vector<2x128xf32>
    %164 = arith.mulf %163, %159 : vector<2x128xf32>
    %165 = arith.addf %154, %164 : vector<2x128xf32>
    %c123_i32 = arith.constant 123 : i32
    %166 = tpu.dynamic_rotate %38 by %c123_i32 dim 1 : vector<2x128xf32>, i32 -> vector<2x128xf32>
    %c123_i32_26 = arith.constant 123 : i32
    %167 = vector.broadcast %c123_i32_26 : i32 to vector<2x128xi32>
    %168 = arith.cmpi slt, %32, %167 : vector<2x128xi32>
    %cst_27 = arith.constant 0.000000e+00 : f32
    %169 = vector.broadcast %cst_27 : f32 to vector<2x128xf32>
    %170 = arith.select %168, %166, %169 : vector<2x128xi1>, vector<2x128xf32>
    %171 = vector.broadcast %12 : f32 to vector<2x128xf32>
    %172 = arith.mulf %171, %170 : vector<2x128xf32>
    %173 = arith.addf %162, %172 : vector<2x128xf32>
    %174 = vector.broadcast %28 : f32 to vector<2x128xf32>
    %175 = arith.mulf %174, %170 : vector<2x128xf32>
    %176 = arith.addf %165, %175 : vector<2x128xf32>
    %c122_i32 = arith.constant 122 : i32
    %177 = tpu.dynamic_rotate %38 by %c122_i32 dim 1 : vector<2x128xf32>, i32 -> vector<2x128xf32>
    %c122_i32_28 = arith.constant 122 : i32
    %178 = vector.broadcast %c122_i32_28 : i32 to vector<2x128xi32>
    %179 = arith.cmpi slt, %32, %178 : vector<2x128xi32>
    %cst_29 = arith.constant 0.000000e+00 : f32
    %180 = vector.broadcast %cst_29 : f32 to vector<2x128xf32>
    %181 = arith.select %179, %177, %180 : vector<2x128xi1>, vector<2x128xf32>
    %182 = vector.broadcast %13 : f32 to vector<2x128xf32>
    %183 = arith.mulf %182, %181 : vector<2x128xf32>
    %184 = arith.addf %173, %183 : vector<2x128xf32>
    %185 = vector.broadcast %29 : f32 to vector<2x128xf32>
    %186 = arith.mulf %185, %181 : vector<2x128xf32>
    %187 = arith.addf %176, %186 : vector<2x128xf32>
    %c121_i32 = arith.constant 121 : i32
    %188 = tpu.dynamic_rotate %38 by %c121_i32 dim 1 : vector<2x128xf32>, i32 -> vector<2x128xf32>
    %c121_i32_30 = arith.constant 121 : i32
    %189 = vector.broadcast %c121_i32_30 : i32 to vector<2x128xi32>
    %190 = arith.cmpi slt, %32, %189 : vector<2x128xi32>
    %cst_31 = arith.constant 0.000000e+00 : f32
    %191 = vector.broadcast %cst_31 : f32 to vector<2x128xf32>
    %192 = arith.select %190, %188, %191 : vector<2x128xi1>, vector<2x128xf32>
    %193 = vector.broadcast %14 : f32 to vector<2x128xf32>
    %194 = arith.mulf %193, %192 : vector<2x128xf32>
    %195 = arith.addf %184, %194 : vector<2x128xf32>
    %196 = vector.broadcast %30 : f32 to vector<2x128xf32>
    %197 = arith.mulf %196, %192 : vector<2x128xf32>
    %198 = arith.addf %187, %197 : vector<2x128xf32>
    %c120_i32 = arith.constant 120 : i32
    %199 = tpu.dynamic_rotate %38 by %c120_i32 dim 1 : vector<2x128xf32>, i32 -> vector<2x128xf32>
    %c120_i32_32 = arith.constant 120 : i32
    %200 = vector.broadcast %c120_i32_32 : i32 to vector<2x128xi32>
    %201 = arith.cmpi slt, %32, %200 : vector<2x128xi32>
    %cst_33 = arith.constant 0.000000e+00 : f32
    %202 = vector.broadcast %cst_33 : f32 to vector<2x128xf32>
    %203 = arith.select %201, %199, %202 : vector<2x128xi1>, vector<2x128xf32>
    %204 = vector.broadcast %15 : f32 to vector<2x128xf32>
    %205 = arith.mulf %204, %203 : vector<2x128xf32>
    %206 = arith.addf %195, %205 : vector<2x128xf32>
    %207 = vector.broadcast %31 : f32 to vector<2x128xf32>
    %208 = arith.mulf %207, %203 : vector<2x128xf32>
    %209 = arith.addf %198, %208 : vector<2x128xf32>
    %c0_34 = arith.constant 0 : index
    %c0_35 = arith.constant 0 : index
    %c0_36 = arith.constant 0 : index
    %210 = vector.load %arg4[%c0_34, %c0_35, %c0_36] : memref<2x2x128xf32, #tpu.memory_space<vmem>>, vector<1x2x128xf32>
    %211 = vector.shape_cast %210 : vector<1x2x128xf32> to vector<2x128xf32>
    %212 = vector.shape_cast %206 : vector<2x128xf32> to vector<1x2x128xf32>
    tpu.vector_store %arg4[%c0_34, %c0_35, %c0_36], %212 {strides = array<i32>} : memref<2x2x128xf32, #tpu.memory_space<vmem>>, vector<1x2x128xf32>,
    %c1_37 = arith.constant 1 : index
    %c0_38 = arith.constant 0 : index
    %c0_39 = arith.constant 0 : index
    %213 = vector.load %arg4[%c1_37, %c0_38, %c0_39] : memref<2x2x128xf32, #tpu.memory_space<vmem>>, vector<1x2x128xf32>
    %214 = vector.shape_cast %213 : vector<1x2x128xf32> to vector<2x128xf32>
    %215 = vector.shape_cast %209 : vector<2x128xf32> to vector<1x2x128xf32>
    tpu.vector_store %arg4[%c1_37, %c0_38, %c0_39], %215 {strides = array<i32>} : memref<2x2x128xf32, #tpu.memory_space<vmem>>, vector<1x2x128xf32>,
    return
  }
  func.func @transform_0(%arg0: i32, %arg1: memref<32xf32, #tpu.memory_space<smem>>, %arg2: memref<2xf32, #tpu.memory_space<smem>>) -> (i32, i32, i32) {
    %c0_i32 = arith.constant 0 : i32
    %c0_i32_0 = arith.constant 0 : i32
    %c0_i32_1 = arith.constant 0 : i32
    return %c0_i32, %arg0, %c0_i32_0 : i32, i32, i32
  }
  func.func @transform_1(%arg0: i32, %arg1: memref<32xf32, #tpu.memory_space<smem>>, %arg2: memref<2xf32, #tpu.memory_space<smem>>) -> (i32, i32, i32) {
    %c0_i32 = arith.constant 0 : i32
    %c0_i32_0 = arith.constant 0 : i32
    %c0_i32_1 = arith.constant 0 : i32
    return %c0_i32, %arg0, %c0_i32_0 : i32, i32, i32
  }
}

</mosaic_0001>

<llo_original>
// kernel: conv1d_same_pallas.1
$region0: #{conv1d_same_pallas.1}
  #allocation0 [shape = 'u32[]', space=smem, size = 0x4, offset = 0x4, fixed_abs, tag = 'smem constant byte address 0x4 - core index']
  #allocation1 [shape = 'u32[144,128]{1,0:T(1,128)}', space=vmem, size = 0x12000, scoped, tag = 'internal scratch']
  #allocation2 [shape = 's32[1]{0}', space=sflag, size = 0x4, scoped, tag = 'scoped memory for conv1d_same_pallas.1']
  #allocation3 [shape = 'u8[512]{0}', space=smem, size = 0x200, scoped, tag = 'prefetched SMEM operand 0']
  #allocation4 [shape = 'u8[512]{0}', space=smem, size = 0x200, scoped, tag = 'prefetched SMEM operand 1']
  %s0 = inlined_call_operand.vmem [shape: f32[32], index: 0, kind: input, shape index: {}]
  %s1 = inlined_call_operand.vmem [shape: f32[2], index: 1, kind: input, shape index: {}]
  %s2 = inlined_call_operand.vmem [shape: f32[1,2,128], index: 2, kind: input, shape index: {}]
  %s3 = inlined_call_operand.vmem [shape: f32[2,2,128], index: 3, kind: output, shape index: {}]
  %s4 = sld [smem:[#allocation0]]
  $region14: #{conv1d_same_pallas.1} parent=0
    _
  %s6 = ssub.s32 1, %s4
  %s7 = scalar_select 0, %s6, %s4
  %s8 = sshll.u32 %s0, 4
  %s9 = int_to_ptr.vmem [resolvable:$true] %s8
  %11 = dma.vmem_to_smem %s9, 16, [#allocation3], [#allocation2]
  %s12 = sshll.u32 %s1, 4
  %s13 = int_to_ptr.vmem [resolvable:$true] %s12
  %15 = dma.vmem_to_smem %s13, 16, [#allocation4], [#allocation2]
  %16 = dma.done [#allocation2], 32
  %17 = sfence
  // Predicated region
  $region2: #{conv1d_same_pallas.1} parent=0 // pred_check
    _
  $region3: #{conv1d_same_pallas.1} parent=0 // pred_check_branch
    %19 = sbr.rel (0) target = $region5
  $region4: #{conv1d_same_pallas.1} parent=0 // pred_region
    _
  $region5: #{conv1d_same_pallas.1} parent=0 // pred_fallthru
    _
  %s20 = sld [smem:[#allocation3]]
  %s21 = sld [smem:[#allocation3 + $0x1]]
  %s22 = sld [smem:[#allocation3 + $0x2]]
  %s23 = sld [smem:[#allocation3 + $0x3]]
  %s24 = sld [smem:[#allocation3 + $0x4]]
  %s25 = sld [smem:[#allocation3 + $0x5]]
  %s26 = sld [smem:[#allocation3 + $0x6]]
  %s27 = sld [smem:[#allocation3 + $0x7]]
  %s28 = sld [smem:[#allocation3 + $0x8]]
  %s29 = sld [smem:[#allocation3 + $0x9]]
  %s30 = sld [smem:[#allocation3 + $0xa]]
  %s31 = sld [smem:[#allocation3 + $0xb]]
  %s32 = sld [smem:[#allocation3 + $0xc]]
  %s33 = sld [smem:[#allocation3 + $0xd]]
  %s34 = sld [smem:[#allocation3 + $0xe]]
  %s35 = sld [smem:[#allocation3 + $0xf]]
  %s36 = sld [smem:[#allocation3 + $0x10]]
  %s37 = sld [smem:[#allocation3 + $0x11]]
  %s38 = sld [smem:[#allocation3 + $0x12]]
  %s39 = sld [smem:[#allocation3 + $0x13]]
  %s40 = sld [smem:[#allocation3 + $0x14]]
  %s41 = sld [smem:[#allocation3 + $0x15]]
  %s42 = sld [smem:[#allocation3 + $0x16]]
  %s43 = sld [smem:[#allocation3 + $0x17]]
  %s44 = sld [smem:[#allocation3 + $0x18]]
  %s45 = sld [smem:[#allocation3 + $0x19]]
  %s46 = sld [smem:[#allocation3 + $0x1a]]
  %s47 = sld [smem:[#allocation3 + $0x1b]]
  %s48 = sld [smem:[#allocation3 + $0x1c]]
  %s49 = sld [smem:[#allocation3 + $0x1d]]
  %s50 = sld [smem:[#allocation3 + $0x1e]]
  %s51 = sld [smem:[#allocation3 + $0x1f]]
  %v52 = vlaneseq
  %v53 = vand.u32 %v52, 127
  %s54 = sld [smem:[#allocation4]]
  %v55 = vstv %s54
  %s56 = sld [smem:[#allocation4 + $0x1]]
  %v57 = vstv %s56
  %v58 = vld [vmem:[%s2] sm:$0x3]
  %59 = vrot.lane.b32.xlu0 %v58, 7
  %v60 = vpop.permute.xlu0 %59
  %vm61 = vcmp.ge.s32.totalorder %v53, 7
  %v62 = vsel %vm61, %v60, 0.0
  %v63 = vstv %s20
  %v64 = vmul.f32 %v63, %v62
  %v65 = vadd.f32 %v55, %v64
  %v66 = vstv %s36
  %v67 = vmul.f32 %v66, %v62
  %v68 = vadd.f32 %v57, %v67
  %69 = vrot.lane.b32.xlu0 %v58, 6
  %v70 = vpop.permute.xlu0 %69
  %vm71 = vcmp.ge.s32.totalorder %v53, 6
  %v72 = vsel %vm71, %v70, 0.0
  %v73 = vstv %s21
  %v74 = vmul.f32 %v73, %v72
  %v75 = vadd.f32 %v65, %v74
  %v76 = vstv %s37
  %v77 = vmul.f32 %v76, %v72
  %v78 = vadd.f32 %v68, %v77
  %79 = vrot.lane.b32.xlu0 %v58, 5
  %v80 = vpop.permute.xlu0 %79
  %vm81 = vcmp.ge.s32.totalorder %v53, 5
  %v82 = vsel %vm81, %v80, 0.0
  %v83 = vstv %s22
  %v84 = vmul.f32 %v83, %v82
  %v85 = vadd.f32 %v75, %v84
  %v86 = vstv %s38
  %v87 = vmul.f32 %v86, %v82
  %v88 = vadd.f32 %v78, %v87
  %89 = vrot.lane.b32.xlu0 %v58, 4
  %v90 = vpop.permute.xlu0 %89
  %vm91 = vcmp.ge.s32.totalorder %v53, 4
  %v92 = vsel %vm91, %v90, 0.0
  %v93 = vstv %s23
  %v94 = vmul.f32 %v93, %v92
  %v95 = vadd.f32 %v85, %v94
  %v96 = vstv %s39
  %v97 = vmul.f32 %v96, %v92
  %v98 = vadd.f32 %v88, %v97
  %99 = vrot.lane.b32.xlu0 %v58, 3
  %v100 = vpop.permute.xlu0 %99
  %vm101 = vcmp.ge.s32.totalorder %v53, 3
  %v102 = vsel %vm101, %v100, 0.0
  %v103 = vstv %s24
  %v104 = vmul.f32 %v103, %v102
  %v105 = vadd.f32 %v95, %v104
  %v106 = vstv %s40
  %v107 = vmul.f32 %v106, %v102
  %v108 = vadd.f32 %v98, %v107
  %109 = vrot.lane.b32.xlu0 %v58, 2
  %v110 = vpop.permute.xlu0 %109
  %vm111 = vcmp.ge.s32.totalorder %v53, 2
  %v112 = vsel %vm111, %v110, 0.0
  %v113 = vstv %s25
  %v114 = vmul.f32 %v113, %v112
  %v115 = vadd.f32 %v105, %v114
  %v116 = vstv %s41
  %v117 = vmul.f32 %v116, %v112
  %v118 = vadd.f32 %v108, %v117
  %119 = vrot.lane.b32.xlu0 %v58, 1
  %v120 = vpop.permute.xlu0 %119
  %vm121 = vcmp.ge.s32.totalorder %v53, 1
  %v122 = vsel %vm121, %v120, 0.0
  %v123 = vstv %s26
  %v124 = vmul.f32 %v123, %v122
  %v125 = vadd.f32 %v115, %v124
  %v126 = vstv %s42
  %v127 = vmul.f32 %v126, %v122
  %v128 = vadd.f32 %v118, %v127
  %v129 = vstv %s27
  %v130 = vmul.f32 %v129, %v58
  %v131 = vadd.f32 %v125, %v130
  %v132 = vstv %s43
  %v133 = vmul.f32 %v132, %v58
  %v134 = vadd.f32 %v128, %v133
  %135 = vrot.lane.b32.xlu0 %v58, 127
  %v136 = vpop.permute.xlu0 %135
  %vm137 = vcmp.lt.s32.totalorder %v53, 127
  %v138 = vsel %vm137, %v136, 0.0
  %v139 = vstv %s28
  %v140 = vmul.f32 %v139, %v138
  %v141 = vadd.f32 %v131, %v140
  %v142 = vstv %s44
  %v143 = vmul.f32 %v142, %v138
  %v144 = vadd.f32 %v134, %v143
  %145 = vrot.lane.b32.xlu0 %v58, 126
  %v146 = vpop.permute.xlu0 %145
  %vm147 = vcmp.lt.s32.totalorder %v53, 126
  %v148 = vsel %vm147, %v146, 0.0
  %v149 = vstv %s29
  %v150 = vmul.f32 %v149, %v148
  %v151 = vadd.f32 %v141, %v150
  %v152 = vstv %s45
  %v153 = vmul.f32 %v152, %v148
  %v154 = vadd.f32 %v144, %v153
  %155 = vrot.lane.b32.xlu0 %v58, 125
  %v156 = vpop.permute.xlu0 %155
  %vm157 = vcmp.lt.s32.totalorder %v53, 125
  %v158 = vsel %vm157, %v156, 0.0
  %v159 = vstv %s30
  %v160 = vmul.f32 %v159, %v158
  %v161 = vadd.f32 %v151, %v160
  %v162 = vstv %s46
  %v163 = vmul.f32 %v162, %v158
  %v164 = vadd.f32 %v154, %v163
  %165 = vrot.lane.b32.xlu0 %v58, 124
  %v166 = vpop.permute.xlu0 %165
  %vm167 = vcmp.lt.s32.totalorder %v53, 124
  %v168 = vsel %vm167, %v166, 0.0
  %v169 = vstv %s31
  %v170 = vmul.f32 %v169, %v168
  %v171 = vadd.f32 %v161, %v170
  %v172 = vstv %s47
  %v173 = vmul.f32 %v172, %v168
  %v174 = vadd.f32 %v164, %v173
  %175 = vrot.lane.b32.xlu0 %v58, 123
  %v176 = vpop.permute.xlu0 %175
  %vm177 = vcmp.lt.s32.totalorder %v53, 123
  %v178 = vsel %vm177, %v176, 0.0
  %v179 = vstv %s32
  %v180 = vmul.f32 %v179, %v178
  %v181 = vadd.f32 %v171, %v180
  %v182 = vstv %s48
  %v183 = vmul.f32 %v182, %v178
  %v184 = vadd.f32 %v174, %v183
  %185 = vrot.lane.b32.xlu0 %v58, 122
  %v186 = vpop.permute.xlu0 %185
  %vm187 = vcmp.lt.s32.totalorder %v53, 122
  %v188 = vsel %vm187, %v186, 0.0
  %v189 = vstv %s33
  %v190 = vmul.f32 %v189, %v188
  %v191 = vadd.f32 %v181, %v190
  %v192 = vstv %s49
  %v193 = vmul.f32 %v192, %v188
  %v194 = vadd.f32 %v184, %v193
  %195 = vrot.lane.b32.xlu0 %v58, 121
  %v196 = vpop.permute.xlu0 %195
  %vm197 = vcmp.lt.s32.totalorder %v53, 121
  %v198 = vsel %vm197, %v196, 0.0
  %v199 = vstv %s34
  %v200 = vmul.f32 %v199, %v198
  %v201 = vadd.f32 %v191, %v200
  %v202 = vstv %s50
  %v203 = vmul.f32 %v202, %v198
  %v204 = vadd.f32 %v194, %v203
  %205 = vrot.lane.b32.xlu0 %v58, 120
  %v206 = vpop.permute.xlu0 %205
  %vm207 = vcmp.lt.s32.totalorder %v53, 120
  %v208 = vsel %vm207, %v206, 0.0
  %v209 = vstv %s35
  %v210 = vmul.f32 %v209, %v208
  %v211 = vadd.f32 %v201, %v210
  %v212 = vstv %s51
  %v213 = vmul.f32 %v212, %v208
  %v214 = vadd.f32 %v204, %v213
  %215 = vst [vmem:[%s3] sm:$0x3] %v211
  %s216 = scalar_lea.vmem %s3, 2
  %217 = vst [vmem:[%s216] sm:$0x3] %v214
  // Predicated region
  $region6: #{conv1d_same_pallas.1} parent=0 // pred_check
    _
  $region7: #{conv1d_same_pallas.1} parent=0 // pred_check_branch
    %219 = sbr.rel (0) target = $region9
  $region8: #{conv1d_same_pallas.1} parent=0 // pred_region
    _
  $region9: #{conv1d_same_pallas.1} parent=0 // pred_fallthru
    _
  // Predicated region
  $region10: #{conv1d_same_pallas.1} parent=0 // pred_check
    _
  $region11: #{conv1d_same_pallas.1} parent=0 // pred_check_branch
    %221 = sbr.rel (0) target = $region13
  $region12: #{conv1d_same_pallas.1} parent=0 // pred_region
    _
  $region13: #{conv1d_same_pallas.1} parent=0 // pred_fallthru
    _

</llo_original>
